<compile_context>
chip_gen: v5e
topology: v5e:2x2
jax: 0.10.0
libtpu: 0.0.40
codegen_flags: <defaults>
</compile_context>

<pallas_src>
import functools

import jax
import jax.numpy as jnp
from jax.experimental import pallas as pl
from jax.experimental.pallas import tpu as pltpu

_HIGH = jax.lax.Precision.HIGHEST


def _sigmoid(s):
    # Plain formula (exp on the EUP); avoids relying on lax.logistic lowering.
    return 1.0 / (1.0 + jnp.exp(-s))


# ------------------------------ kernels ------------------------------------


def _fused_kernel(x_ref, w1_ref, w2_ref, o_ref, *, inv_hw):
    """Single-pass SE: pool + excite + scale for one batch element's slab."""
    # x_ref/o_ref: (1, C, HWp) input dtype; w1_ref: (mid, C); w2_ref: (C, mid).
    x = x_ref[0]                                                    # (C, HWp)
    pooled = jnp.sum(x, axis=-1, keepdims=True,
                     dtype=jnp.float32) * inv_hw                    # (C, 1) fp32
    h = jnp.maximum(
        jnp.dot(w1_ref[...], pooled,
                preferred_element_type=jnp.float32, precision=_HIGH), 0.0)
    gate = _sigmoid(
        jnp.dot(w2_ref[...], h,
                preferred_element_type=jnp.float32, precision=_HIGH))  # (C, 1)
    # Multiply in fp32 (type promotion), single downcast -> matches reference.
    o_ref[0] = (x * gate).astype(o_ref.dtype)


def _pool_excite_kernel(x_ref, w1_ref, w2_ref, y_ref, acc_ref, *, inv_hw):
    """Two-pass path, pass 1: spatial-sum accumulation + excitation."""
    # x_ref: (1, C, hw_tile); y_ref: (1, C, 1) fp32 gate; acc_ref: (C, 1) fp32.
    t = pl.program_id(1)

    @pl.when(t == 0)
    def _init():
        acc_ref[...] = jnp.zeros_like(acc_ref)

    # TODO(synk): if profiling ever shows v5e's (no-bf16) VPU/XLU binding on
    # this reduction, switch it to an MXU matvec against a ones column.
    acc_ref[...] += jnp.sum(x_ref[0], axis=-1, keepdims=True, dtype=jnp.float32)

    @pl.when(t == pl.num_programs(1) - 1)
    def _finalize():
        pooled = acc_ref[...] * inv_hw                              # (C, 1) fp32
        h = jnp.maximum(
            jnp.dot(w1_ref[...], pooled,
                    preferred_element_type=jnp.float32, precision=_HIGH), 0.0)
        y_ref[0] = _sigmoid(
            jnp.dot(w2_ref[...], h,
                    preferred_element_type=jnp.float32, precision=_HIGH))


def _scale_kernel(y_ref, x_ref, o_ref):
    """Two-pass path, pass 2: channel-wise rescale of one activation block."""
    # y_ref: (1, C, 1) fp32 gate; x_ref/o_ref: (1, C, hw_tile) input dtype.
    # fp32 multiply via promotion, single downcast.
    o_ref[...] = (x_ref[...] * y_ref[...]).astype(o_ref.dtype)


# ------------------------------ helpers ------------------------------------


def _round_up(x, m):
    return -(-x // m) * m


def _vmem_capacity_bytes():
    try:
        cap = getattr(pltpu.get_tpu_info(), "vmem_capacity_bytes", None)
        if cap:
            return int(cap)
    except Exception:
        pass
    return 64 << 20  # conservative: v7x physical VMEM per TensorCore


def _choose_hw_tile(hw_pad, row_bytes, target_block_bytes):
    """Largest multiple of 128 dividing hw_pad with block <= target bytes."""
    max_elems = max(128, target_block_bytes // max(row_bytes, 1))
    n128 = hw_pad // 128
    best = 128
    for k in range(1, n128 + 1):
        if n128 % k == 0 and k * 128 <= max_elems:
            best = k * 128
    return best


def _compiler_params(semantics, need_bytes, cap_bytes):
    ceiling = max(cap_bytes - (8 << 20), 24 << 20)
    limit = int(min(max(need_bytes + (6 << 20), 32 << 20), ceiling))
    return pltpu.CompilerParams(
        dimension_semantics=semantics, vmem_limit_bytes=limit)


# ------------------------------ wrapper ------------------------------------


def se_block(x, w1, w2, *, force_two_pass=False):
    """SE_Block forward.

    x:  (B, C, H, W) NCHW activation.
    w1: (C//r, C) = fc1.weight (PyTorch (out, in) layout, bias-free).
    w2: (C, C//r) = fc2.weight.
    """
    B, C, H, W = x.shape
    HW = H * W
    mid = w1.shape[0]
    itemsize = jnp.dtype(x.dtype).itemsize
    w_bytes = 2 * C * mid * jnp.dtype(w1.dtype).itemsize
    cap = _vmem_capacity_bytes()

    # Flatten spatial to the lane axis and zero-pad to a multiple of 128.
    # Zero padding is harmless: the pooled mean divides by the true HW and the
    # padded tail is sliced off at the end.
    HWp = _round_up(HW, 128)
    x3 = x.reshape(B, C, HW)
    x3p = x3 if HWp == HW else jnp.pad(x3, ((0, 0), (0, 0), (0, HWp - HW)))
    inv_hw = 1.0 / HW

    slab_bytes = C * HWp * itemsize                 # one batch element's slab
    fused_need = 4 * slab_bytes + 2 * w_bytes + 8 * C
    use_fused = (not force_two_pass
                 and slab_bytes <= (16 << 20)
                 and fused_need <= cap - (16 << 20))

    if use_fused:
        # ----- Fused fast path: 1 read + 1 write of x (vs 2R + 1W) -----
        out = pl.pallas_call(
            functools.partial(_fused_kernel, inv_hw=inv_hw),
            out_shape=jax.ShapeDtypeStruct((B, C, HWp), x.dtype),
            grid_spec=pltpu.PrefetchScalarGridSpec(
                num_scalar_prefetch=0,
                grid=(B,),
                in_specs=[
                    pl.BlockSpec((1, C, HWp), lambda b: (b, 0, 0)),
                    pl.BlockSpec((mid, C), lambda b: (0, 0)),
                    pl.BlockSpec((C, mid), lambda b: (0, 0)),
                ],
                out_specs=pl.BlockSpec((1, C, HWp), lambda b: (b, 0, 0)),
            ),
            compiler_params=_compiler_params(("parallel",), fused_need, cap),
            cost_estimate=pl.CostEstimate(
                flops=int(2 * B * C * HW + 4 * B * C * mid),
                transcendentals=int(B * C),
                bytes_accessed=int(2 * B * C * HWp * itemsize + 2 * w_bytes),
            ),
        )(x3p, w1, w2)
    else:
        # ----- Two-pass path: activation too large to keep resident -----
        target_block = (4 << 20) if cap <= (64 << 20) else (8 << 20)
        hw_tile = _choose_hw_tile(HWp, C * itemsize, target_block)
        n_tiles = HWp // hw_tile
        blk_bytes = C * hw_tile * itemsize

        # Pass 1: global average pool + excitation -> gate (B, C, 1) fp32.
        pass1_need = 2 * (blk_bytes + w_bytes + 4 * C) + 4 * C
        y = pl.pallas_call(
            functools.partial(_pool_excite_kernel, inv_hw=inv_hw),
            out_shape=jax.ShapeDtypeStruct((B, C, 1), jnp.float32),
            grid_spec=pltpu.PrefetchScalarGridSpec(
                num_scalar_prefetch=0,
                grid=(B, n_tiles),
                in_specs=[
                    pl.BlockSpec((1, C, hw_tile), lambda b, t: (b, 0, t)),
                    pl.BlockSpec((mid, C), lambda b, t: (0, 0)),
                    pl.BlockSpec((C, mid), lambda b, t: (0, 0)),
                ],
                out_specs=pl.BlockSpec((1, C, 1), lambda b, t: (b, 0, 0)),
                scratch_shapes=[pltpu.VMEM((C, 1), jnp.float32)],
            ),
            compiler_params=_compiler_params(("parallel", "arbitrary"),
                                             pass1_need, cap),
            cost_estimate=pl.CostEstimate(
                flops=int(B * C * HW + 4 * B * C * mid),
                transcendentals=int(B * C),
                bytes_accessed=int(B * C * HWp * itemsize + 2 * w_bytes
                                   + 4 * B * C),
            ),
        )(x3p, w1, w2)

        # Pass 2: channel-wise rescale, tiled over (batch, spatial tiles).
        # TODO(synk): a lane-dense (B, C) gate block would shave a tiny DMA +
        # broadcast; kept on the known-good (1, C, 1) layout path here.
        pass2_need = 2 * (4 * C + 2 * blk_bytes)
        out = pl.pallas_call(
            _scale_kernel,
            out_shape=jax.ShapeDtypeStruct((B, C, HWp), x.dtype),
            grid_spec=pltpu.PrefetchScalarGridSpec(
                num_scalar_prefetch=0,
                grid=(B, n_tiles),
                in_specs=[
                    pl.BlockSpec((1, C, 1), lambda b, t: (b, 0, 0)),       # gate
                    pl.BlockSpec((1, C, hw_tile), lambda b, t: (b, 0, t)),  # x
                ],
                out_specs=pl.BlockSpec((1, C, hw_tile), lambda b, t: (b, 0, t)),
            ),
            compiler_params=_compiler_params(("parallel", "parallel"),
                                             pass2_need, cap),
            cost_estimate=pl.CostEstimate(
                flops=int(B * C * HW),
                transcendentals=0,
                bytes_accessed=int(2 * B * C * HWp * itemsize + 4 * B * C),
            ),
        )(y, x3p)

    if HWp != HW:
        out = out[:, :, :HW]
    return out.reshape(B, C, H, W)


def se_block_ref(x, w1, w2):
    """Pure-JAX reference mirroring the PyTorch forward (fp32 math)."""
    xf = x.astype(jnp.float32)
    pooled = jnp.mean(xf, axis=(2, 3))                               # (B, C)
    h = jnp.maximum(
        jnp.matmul(pooled, w1.astype(jnp.float32).T, precision=_HIGH), 0.0)
    y = jax.nn.sigmoid(
        jnp.matmul(h, w2.astype(jnp.float32).T, precision=_HIGH))    # (B, C)
    return (xf * y[:, :, None, None]).astype(x.dtype)


if __name__ == "__main__":
    B, C, H, W = 2, 32, 16, 16
    reduction = 16
    mid = C // reduction

    key = jax.random.PRNGKey(0)
    kx, kx2, k1, k2 = jax.random.split(key, 4)

    # PyTorch Linear stores weight as (out, in); kernels consume that layout.
    w1 = jax.random.normal(k1, (mid, C), dtype=jnp.float32) * 0.1   # fc1.weight
    w2 = jax.random.normal(k2, (C, mid), dtype=jnp.float32) * 0.1   # fc2.weight

    x = jax.random.normal(kx, (B, C, H, W), dtype=jnp.float32)        # HW = 256
    x_odd = jax.random.normal(kx2, (B, C, 14, 14), dtype=jnp.float32)  # HW = 196

    cases = [
        ("fused", x, {}),
        ("two_pass", x, {"force_two_pass": True}),
        ("fused_padded", x_odd, {}),
        ("two_pass_padded", x_odd, {"force_two_pass": True}),
    ]
    for name, xin, kw in cases:
        out = jax.block_until_ready(se_block(xin, w1, w2, **kw))
        ref = se_block_ref(xin, w1, w2)
        assert out.shape == xin.shape, f"shape mismatch: {name}"
        assert jnp.allclose(out, ref, atol=2e-5, rtol=2e-5), (
            f"mismatch vs reference: {name}")
    print("KERNEL_OK")
</pallas_src>

<mosaic_0001>
module attributes {stable_mosaic.version = 11 : i64} {
  func.func @_fused_kernel(%arg0: i32, %arg1: memref<1x32x256xf32, #tpu.memory_space<vmem>>, %arg2: memref<2x32xf32, #tpu.memory_space<vmem>>, %arg3: memref<32x2xf32, #tpu.memory_space<vmem>>, %arg4: memref<1x32x256xf32, #tpu.memory_space<vmem>>) attributes {dimension_semantics = [#tpu.dimension_semantics<parallel>], iteration_bounds = array<i64: 2>, scalar_prefetch = 0 : i64, scratch_operands = 0 : i64, tpu.core_type = #tpu.core_type<tc>, window_params = [{transform_indices = @transform_0, window_bounds = array<i64: 1, 32, 256>}, {pipeline_mode = #tpu.pipeline_mode<synchronous>, transform_indices = @transform_1, window_bounds = array<i64: 2, 32>}, {pipeline_mode = #tpu.pipeline_mode<synchronous>, transform_indices = @transform_2, window_bounds = array<i64: 32, 2>}, {transform_indices = @transform_3, window_bounds = array<i64: 1, 32, 256>}]} {
    %c0 = arith.constant 0 : index
    %c0_0 = arith.constant 0 : index
    %c0_1 = arith.constant 0 : index
    %0 = vector.load %arg1[%c0, %c0_0, %c0_1] : memref<1x32x256xf32, #tpu.memory_space<vmem>>, vector<1x32x256xf32>
    %1 = vector.shape_cast %0 : vector<1x32x256xf32> to vector<32x256xf32>
    %cst = arith.constant dense<0.000000e+00> : vector<32xf32>
    %2 = vector.multi_reduction <add>, %1, %cst [1] : vector<32x256xf32> to vector<32xf32>
    %3 = vector.shape_cast %2 : vector<32xf32> to vector<32x1xf32>
    %cst_2 = arith.constant 3.906250e-03 : f32
    %4 = vector.broadcast %cst_2 : f32 to vector<32x1xf32>
    %5 = arith.mulf %3, %4 : vector<32x1xf32>
    %c0_3 = arith.constant 0 : index
    %c0_4 = arith.constant 0 : index
    %6 = vector.load %arg2[%c0_3, %c0_4] : memref<2x32xf32, #tpu.memory_space<vmem>>, vector<2x32xf32>
    %cst_5 = arith.constant dense<0.000000e+00> : vector<2x1xf32>
    %7 = tpu.matmul %6, %5, %cst_5 {dimension_numbers = #tpu.dot_dimension_numbers<[1], [0], [0], [1], [0, 0, 1, 1], [], []>, precision = #tpu.contract_precision<fp32>} : vector<2x32xf32>, vector<32x1xf32>, vector<2x1xf32> -> vector<2x1xf32>
    %cst_6 = arith.constant 0.000000e+00 : f32
    %8 = vector.broadcast %cst_6 : f32 to vector<2x1xf32>
    %9 = arith.maximumf %7, %8 : vector<2x1xf32>
    %c0_7 = arith.constant 0 : index
    %c0_8 = arith.constant 0 : index
    %10 = vector.load %arg3[%c0_7, %c0_8] : memref<32x2xf32, #tpu.memory_space<vmem>>, vector<32x2xf32>
    %cst_9 = arith.constant dense<0.000000e+00> : vector<32x1xf32>
    %11 = tpu.matmul %10, %9, %cst_9 {dimension_numbers = #tpu.dot_dimension_numbers<[1], [0], [0], [1], [0, 0, 1, 1], [], []>, precision = #tpu.contract_precision<fp32>} : vector<32x2xf32>, vector<2x1xf32>, vector<32x1xf32> -> vector<32x1xf32>
    %cst_10 = arith.constant 0.000000e+00 : f32
    %12 = vector.broadcast %cst_10 : f32 to vector<32x1xf32>
    %13 = arith.subf %12, %11 : vector<32x1xf32>
    %14 = math.exp %13 : vector<32x1xf32>
    %cst_11 = arith.constant 1.000000e+00 : f32
    %15 = vector.broadcast %cst_11 : f32 to vector<32x1xf32>
    %16 = arith.addf %15, %14 : vector<32x1xf32>
    %cst_12 = arith.constant 1.000000e+00 : f32
    %17 = vector.broadcast %cst_12 : f32 to vector<32x1xf32>
    %18 = arith.divf %17, %16 : vector<32x1xf32>
    %19 = vector.broadcast %18 : vector<32x1xf32> to vector<32x256xf32>
    %20 = arith.mulf %1, %19 : vector<32x256xf32>
    %c0_13 = arith.constant 0 : index
    %c0_14 = arith.constant 0 : index
    %c0_15 = arith.constant 0 : index
    %21 = vector.load %arg4[%c0_13, %c0_14, %c0_15] : memref<1x32x256xf32, #tpu.memory_space<vmem>>, vector<1x32x256xf32>
    %22 = vector.shape_cast %21 : vector<1x32x256xf32> to vector<32x256xf32>
    %23 = vector.shape_cast %20 : vector<32x256xf32> to vector<1x32x256xf32>
    tpu.vector_store %arg4[%c0_13, %c0_14, %c0_15], %23 {strides = array<i32>} : memref<1x32x256xf32, #tpu.memory_space<vmem>>, vector<1x32x256xf32>,
    return
  }
  func.func @transform_0(%arg0: i32) -> (i32, i32, i32) {
    %c0_i32 = arith.constant 0 : i32
    %c0_i32_0 = arith.constant 0 : i32
    %c0_i32_1 = arith.constant 0 : i32
    return %arg0, %c0_i32, %c0_i32_0 : i32, i32, i32
  }
  func.func @transform_1(%arg0: i32) -> (i32, i32) {
    %c0_i32 = arith.constant 0 : i32
    %c0_i32_0 = arith.constant 0 : i32
    %c0_i32_1 = arith.constant 0 : i32
    return %c0_i32, %c0_i32_0 : i32, i32
  }
  func.func @transform_2(%arg0: i32) -> (i32, i32) {
    %c0_i32 = arith.constant 0 : i32
    %c0_i32_0 = arith.constant 0 : i32
    %c0_i32_1 = arith.constant 0 : i32
    return %c0_i32, %c0_i32_0 : i32, i32
  }
  func.func @transform_3(%arg0: i32) -> (i32, i32, i32) {
    %c0_i32 = arith.constant 0 : i32
    %c0_i32_0 = arith.constant 0 : i32
    %c0_i32_1 = arith.constant 0 : i32
    return %arg0, %c0_i32, %c0_i32_0 : i32, i32, i32
  }
}

</mosaic_0001>

<llo_original>
// kernel: tpu_custom_call.1
$region0: #{tpu_custom_call.1}
  #allocation0 [shape = 'u32[]', space=smem, size = 0x4, offset = 0x4, fixed_abs, tag = 'smem constant byte address 0x4 - core index']
  #allocation1 [shape = 'u32[72,128]{1,0:T(1,128)}', space=vmem, size = 0x9000, scoped, tag = 'internal scratch']
  %s0 = inlined_call_operand.hbm [shape: f32[2,32,256], index: 0, kind: input, shape index: {}]
  %s1 = inlined_call_operand.vmem [shape: f32[2,32], index: 1, kind: input, shape index: {}]
  %s2 = inlined_call_operand.vmem [shape: f32[32,2], index: 2, kind: input, shape index: {}]
  %s3 = inlined_call_operand.hbm [shape: f32[2,32,256], index: 3, kind: output, shape index: {}]
  %s4 = sld [smem:[#allocation0]]
  $region49: #{tpu_custom_call.1} parent=0
    _
  %s6 = ssub.s32 1, %s4
  %s7 = scalar_select 0, %s6, %s4
  $region1: #{tpu_custom_call.1} parent=0
    #allocation2 [shape = 'u8[65536]{0}', space=vmem, size = 0x10000, scoped, tag = 'input window, operand 0']
    #allocation3 [shape = 's32[2]{0}', space=sflag, size = 0x8, scoped, tag = 'scoped memory for tpu_custom_call.1']
    #allocation4 [shape = 's32[2]{0}', space=sflag, size = 0x8, scoped, tag = 'scoped memory for tpu_custom_call.1']
    #allocation5 [shape = 'u8[65536]{0}', space=vmem, size = 0x10000, scoped, tag = 'output window, operand 0']
    %8 = vsyncpa [#allocation3], 0
    %s9 = scalar_lea.sflag [#allocation3], 1
    %10 = vsyncpa %s9, 0
    %11 = vsyncpa [#allocation4], 0
    %s12 = scalar_lea.sflag [#allocation4], 1
    %13 = vsyncpa %s12, 0
    loop: start=0, step=1, limit=4
    $region2: #{tpu_custom_call.1} parent=1 // loop_pre_header
      _
    $region3: #{tpu_custom_call.1} parent=1 // loop_header
      %s15 = sphi 0, %s19
      %p16 = scmp.ge.s32.totalorder %s15, 4
      %s25 = sphi 0, %s27
      %s28 = sphi 0, %s25
      %s29 = sphi 0, %s28
      %s45 = sphi 0, %s29
      %s49 = sphi 0, %s49
      %s51 = sphi 0, %s49
      %s52 = sphi 0, %s51
      %s66 = sphi 0, %s52
      %s70 = sphi 0, %s70
      %s72 = sphi 0, %s70
      %s73 = sphi 0, %s72
      %s87 = sphi 0, %s73
      %s93 = sphi 0, %s95
      %s96 = sphi 0, %s93
      %s97 = sphi 0, %s96
      %s113 = sphi 0, %s97
    $region4: #{tpu_custom_call.1} parent=1 // loop_header_branch
      %18 = sbr.rel (%p16) target = $region8
    $region5: #{tpu_custom_call.1} parent=1 // loop_body
      %s20 = ssub.s32 %s15, 1
      %s21 = ssub.s32 %s15, 2
      %s22 = sadd.s32 %s15, 1
      %s23 = ssub.s32 %s15, %s22
      %p24 = scmp.eq.s32.totalorder %s23, 0
      %s26 = sadd.s32 %s25, 1
      %s27 = scalar_select %p24, %s25, %s26
      %p30 = pneg %p24
      %p31 = scmp.eq.s32.totalorder %s15, 1
      %p32 = por %p30, %p31
      %p33 = scmp.ne.s32.totalorder %s25, %s28
      %p34 = scmp.eq.s32.totalorder %s15, 0
      %p35 = por %p33, %p34
      %p36 = scmp.ne.s32.totalorder %s25, %s28
      %p37 = scmp.eq.s32.totalorder %s20, 1
      %p38 = por %p36, %p37
      %p39 = scmp.ne.s32.totalorder %s28, %s29
      %p40 = scmp.eq.s32.totalorder %s20, 0
      %p41 = por %p39, %p40
      %p42 = scmp.ne.s32.totalorder %s28, %s29
      %p43 = scmp.eq.s32.totalorder %s21, 1
      %p44 = por %p42, %p43
      %p46 = scmp.ne.s32.totalorder %s29, %s45
      %p47 = scmp.eq.s32.totalorder %s21, 0
      %p48 = por %p46, %p47
      %s50 = sadd.s32 %s49, 1
      %p53 = scmp.eq.s32.totalorder %s15, 1
      %p54 = scmp.ne.s32.totalorder %s49, %s51
      %p55 = scmp.eq.s32.totalorder %s15, 0
      %p56 = por %p54, %p55
      %p57 = scmp.ne.s32.totalorder %s49, %s51
      %p58 = scmp.eq.s32.totalorder %s20, 1
      %p59 = por %p57, %p58
      %p60 = scmp.ne.s32.totalorder %s51, %s52
      %p61 = scmp.eq.s32.totalorder %s20, 0
      %p62 = por %p60, %p61
      %p63 = scmp.ne.s32.totalorder %s51, %s52
      %p64 = scmp.eq.s32.totalorder %s21, 1
      %p65 = por %p63, %p64
      %p67 = scmp.ne.s32.totalorder %s52, %s66
      %p68 = scmp.eq.s32.totalorder %s21, 0
      %p69 = por %p67, %p68
      %s71 = sadd.s32 %s70, 1
      %p74 = scmp.eq.s32.totalorder %s15, 1
      %p75 = scmp.ne.s32.totalorder %s70, %s72
      %p76 = scmp.eq.s32.totalorder %s15, 0
      %p77 = por %p75, %p76
      %p78 = scmp.ne.s32.totalorder %s70, %s72
      %p79 = scmp.eq.s32.totalorder %s20, 1
      %p80 = por %p78, %p79
      %p81 = scmp.ne.s32.totalorder %s72, %s73
      %p82 = scmp.eq.s32.totalorder %s20, 0
      %p83 = por %p81, %p82
      %p84 = scmp.ne.s32.totalorder %s72, %s73
      %p85 = scmp.eq.s32.totalorder %s21, 1
      %p86 = por %p84, %p85
      %p88 = scmp.ne.s32.totalorder %s73, %s87
      %p89 = scmp.eq.s32.totalorder %s21, 0
      %p90 = por %p88, %p89
      %s91 = ssub.s32 %s15, %s22
      %p92 = scmp.eq.s32.totalorder %s91, 0
      %s94 = sadd.s32 %s93, 1
      %s95 = scalar_select %p92, %s93, %s94
      %p98 = pneg %p92
      %p99 = scmp.eq.s32.totalorder %s15, 1
      %p100 = por %p98, %p99
      %p101 = scmp.ne.s32.totalorder %s93, %s96
      %p102 = scmp.eq.s32.totalorder %s15, 0
      %p103 = por %p101, %p102
      %p104 = scmp.ne.s32.totalorder %s93, %s96
      %p105 = scmp.eq.s32.totalorder %s20, 1
      %p106 = por %p104, %p105
      %p107 = scmp.ne.s32.totalorder %s96, %s97
      %p108 = scmp.eq.s32.totalorder %s20, 0
      %p109 = por %p107, %p108
      %p110 = scmp.ne.s32.totalorder %s96, %s97
      %p111 = scmp.eq.s32.totalorder %s21, 1
      %p112 = por %p110, %p111
      %p114 = scmp.ne.s32.totalorder %s97, %s113
      %p115 = scmp.eq.s32.totalorder %s21, 0
      %p116 = por %p114, %p115
      %p117 = scmp.le.s32.totalorder 1, %s15
      %p118 = scmp.lt.s32.totalorder %s15, 3
      %p119 = pnand %p117, %p118
      %p120 = pneg %p119
      // Predicated region
      $region9: #{tpu_custom_call.1} parent=5 // pred_check
        _
      $region10: #{tpu_custom_call.1} parent=5 // pred_check_branch
        %122 = sbr.rel (%p119) target = $region12
      $region11: #{tpu_custom_call.1} parent=5 // pred_region
        %s123 = ssub.s32 %s15, 1
        // Predicated region
        $region13: #{tpu_custom_call.1} parent=11 // pred_check
          %p124 = pneg %p62
        $region14: #{tpu_custom_call.1} parent=11 // pred_check_branch
          %126 = sbr.rel (%p124) target = $region16
        $region15: #{tpu_custom_call.1} parent=11 // pred_region
          _
        $region16: #{tpu_custom_call.1} parent=11 // pred_fallthru
          _
        // Predicated region
        $region17: #{tpu_custom_call.1} parent=11 // pred_check
          %p127 = pneg %p83
        $region18: #{tpu_custom_call.1} parent=11 // pred_check_branch
          %129 = sbr.rel (%p127) target = $region20
        $region19: #{tpu_custom_call.1} parent=11 // pred_region
          _
        $region20: #{tpu_custom_call.1} parent=11 // pred_fallthru
          _
      $region12: #{tpu_custom_call.1} parent=5 // pred_fallthru
        _
      %p130 = scmp.lt.s32.totalorder %s15, 2
      // Predicated region
      $region21: #{tpu_custom_call.1} parent=5 // pred_check
        %p131 = pneg %p130
      $region22: #{tpu_custom_call.1} parent=5 // pred_check_branch
        %133 = sbr.rel (%p131) target = $region24
      $region23: #{tpu_custom_call.1} parent=5 // pred_region
        // Predicated region
        $region25: #{tpu_custom_call.1} parent=23 // pred_check
          %p134 = pneg %p35
        $region26: #{tpu_custom_call.1} parent=23 // pred_check_branch
          %136 = sbr.rel (%p134) target = $region28
        $region27: #{tpu_custom_call.1} parent=23 // pred_region
          %s137 = sand.u32 %s25, 1
          %s138 = scalar_lea.sflag [#allocation3], %s137
          %s139 = sand.u32 %s25, 1
          %s140 = smul.addr %s139, 64
          %s141 = scalar_lea.vmem [#allocation2], %s140
          %143 = vsyncadd %s138, 0
          %s144 = smul.addr %s15, 8
          %s145 = smul.addr %s144, 8
          %s146 = scalar_lea.hbm %s0, %s145
          %s147 = sshll.u32 %s146, 4
          %s148 = int_to_ptr.hbm [resolvable:$true] %s147
          %s149 = sshll.u32 %s141, 4
          %s150 = int_to_ptr.vmem [resolvable:$true] %s149
          %155 = dma.hbm_to_vmem [thread:$0]  %s148, 1024, %s150, %s138, 256, 256, 16
        $region28: #{tpu_custom_call.1} parent=23 // pred_fallthru
          _
      $region24: #{tpu_custom_call.1} parent=5 // pred_fallthru
        _
      %p156 = scmp.le.s32.totalorder 1, %s15
      %p157 = scmp.lt.s32.totalorder %s15, 3
      %p158 = pnand %p156, %p157
      %p159 = pneg %p158
      // Predicated region
      $region29: #{tpu_custom_call.1} parent=5 // pred_check
        _
      $region30: #{tpu_custom_call.1} parent=5 // pred_check_branch
        %161 = sbr.rel (%p158) target = $region32
      $region31: #{tpu_custom_call.1} parent=5 // pred_region
        %s162 = ssub.s32 %s15, 1
        %s163 = sand.u32 %s28, 1
        %s164 = scalar_lea.sflag [#allocation3], %s163
        %s165 = sand.u32 %s28, 1
        %s166 = smul.addr %s165, 64
        %s167 = scalar_lea.vmem [#allocation2], %s166
        // Predicated region
        $region33: #{tpu_custom_call.1} parent=31 // pred_check
          %p168 = pneg %p41
        $region34: #{tpu_custom_call.1} parent=31 // pred_check_branch
          %170 = sbr.rel (%p168) target = $region36
        $region35: #{tpu_custom_call.1} parent=31 // pred_region
          %172 = dma.done %s164, 1024
        $region36: #{tpu_custom_call.1} parent=31 // pred_fallthru
          _
        %s173 = sand.u32 %s28, 1
        %s174 = scalar_lea.sflag [#allocation3], %s173
        %s175 = sand.u32 %s28, 1
        %s176 = smul.addr %s175, 64
        %s177 = scalar_lea.vmem [#allocation2], %s176
        %p178 = pneg %p41
        %p179 = pneg %p38
        %p180 = pneg %p62
        %p181 = pneg %p59
        %p182 = pneg %p83
        %p183 = pneg %p80
        %p184 = pneg %p109
        %p185 = pneg %p106
        %s186 = sand.u32 %s96, 1
        %s187 = scalar_lea.sflag [#allocation4], %s186
        %s188 = sand.u32 %s96, 1
        %s189 = smul.addr %s188, 64
        %s190 = scalar_lea.vmem [#allocation5], %s189
        %v191 = vld [vmem:[%s167] sm:$0xff]
        %v192 = vld [vmem:[%s167 + $0x8] sm:$0xff]
        %v193 = vld [vmem:[%s167 + $0x10] sm:$0xff]
        %v194 = vld [vmem:[%s167 + $0x18] sm:$0xff]
        %v195 = vld [vmem:[%s167 + $0x20] sm:$0xff]
        %v196 = vld [vmem:[%s167 + $0x28] sm:$0xff]
        %v197 = vld [vmem:[%s167 + $0x30] sm:$0xff]
        %v198 = vld [vmem:[%s167 + $0x38] sm:$0xff]
        %v199 = vadd.f32 %v191, %v192
        %200 = vadd.xlane.f32.xlu0 %v199
        %v201 = vpop.xlane.xlu0 %200
        %v202 = vadd.f32 %v193, %v194
        %203 = vadd.xlane.f32.xlu0 %v202
        %v204 = vpop.xlane.xlu0 %203
        %v205 = vadd.f32 %v195, %v196
        %206 = vadd.xlane.f32.xlu0 %v205
        %v207 = vpop.xlane.xlu0 %206
        %v208 = vadd.f32 %v197, %v198
        %209 = vadd.xlane.f32.xlu0 %v208
        %v210 = vpop.xlane.xlu0 %209
        %v211 = vmul.f32 %v201, 0.00390625
        %v212 = vmul.f32 %v204, 0.00390625
        %v213 = vmul.f32 %v207, 0.00390625
        %v214 = vmul.f32 %v210, 0.00390625
        %v215 = vld [vmem:[%s1] sm:$0x3]
        %vm216 = vcmask 261120
        %v218 = vsel %vm216, %v215, 0
        %220 = vmatpush.msra.mxu0 0.0
        %221 = vmatpush.msra.mxu0 0.0
        %222 = vmatpush.msra.mxu0 0.0
        %223 = vmatpush.msra.mxu0 0.0
        %224 = vmatpush.msra.mxu0 0.0
        %225 = vmatpush.msra.mxu0 0.0
        %226 = vmatpush.msra.mxu0 0.0
        %227 = vmatpush.msra.mxu0 0.0
        %228 = vmatpush.msra.mxu0 0.0
        %229 = vmatpush.msra.mxu0 0.0
        %230 = vmatpush.msra.mxu0 0.0
        %231 = vmatpush.msra.mxu0 0.0
        %v232 = vand.u32 %v214, 4294901760
        %233 = vmatpush.msra.mxu0 %v232
        %v234 = vand.u32 %v213, 4294901760
        %235 = vmatpush.msra.mxu0 %v234
        %v236 = vand.u32 %v212, 4294901760
        %237 = vmatpush.msra.mxu0 %v236
        %v238 = vand.u32 %v211, 4294901760
        %239 = vmatpush.msra.mxu0 %v238
        %v240 = vand.u32 %v218, 4294901760
        %v241 = vsub.f32 %v218, %v240
        %v242 = vand.u32 %v241, 4294901760
        %v243 = vsub.f32 %v241, %v242
        %v244 = vand.u32 %v243, 4294901760
        %245 = vmatmul.f32.gmra.mxu0 %v244
        %v246 = vpop.f32.mrf.mxu0
        %v247 = vadd.f32 0.0, %v246
        %248 = vdwg.mxu0
        %249 = vmatpush.msra.mxu0 0.0
        %250 = vmatpush.msra.mxu0 0.0
        %251 = vmatpush.msra.mxu0 0.0
        %252 = vmatpush.msra.mxu0 0.0
        %253 = vmatpush.msra.mxu0 0.0
        %254 = vmatpush.msra.mxu0 0.0
        %255 = vmatpush.msra.mxu0 0.0
        %256 = vmatpush.msra.mxu0 0.0
        %257 = vmatpush.msra.mxu0 0.0
        %258 = vmatpush.msra.mxu0 0.0
        %259 = vmatpush.msra.mxu0 0.0
        %260 = vmatpush.msra.mxu0 0.0
        %v261 = vand.u32 %v214, 4294901760
        %v262 = vsub.f32 %v214, %v261
        %v263 = vand.u32 %v262, 4294901760
        %v264 = vsub.f32 %v262, %v263
        %v265 = vand.u32 %v264, 4294901760
        %266 = vmatpush.msra.mxu0 %v265
        %v267 = vand.u32 %v213, 4294901760
        %v268 = vsub.f32 %v213, %v267
        %v269 = vand.u32 %v268, 4294901760
        %v270 = vsub.f32 %v268, %v269
        %v271 = vand.u32 %v270, 4294901760
        %272 = vmatpush.msra.mxu0 %v271
        %v273 = vand.u32 %v212, 4294901760
        %v274 = vsub.f32 %v212, %v273
        %v275 = vand.u32 %v274, 4294901760
        %v276 = vsub.f32 %v274, %v275
        %v277 = vand.u32 %v276, 4294901760
        %278 = vmatpush.msra.mxu0 %v277
        %v279 = vand.u32 %v211, 4294901760
        %v280 = vsub.f32 %v211, %v279
        %v281 = vand.u32 %v280, 4294901760
        %v282 = vsub.f32 %v280, %v281
        %v283 = vand.u32 %v282, 4294901760
        %284 = vmatpush.msra.mxu0 %v283
        %v285 = vand.u32 %v218, 4294901760
        %286 = vmatmul.f32.gmra.mxu0 %v285
        %v287 = vpop.f32.mrf.mxu0
        %v288 = vadd.f32 %v247, %v287
        %289 = vdwg.mxu0
        %290 = vmatpush.msra.mxu0 0.0
        %291 = vmatpush.msra.mxu0 0.0
        %292 = vmatpush.msra.mxu0 0.0
        %293 = vmatpush.msra.mxu0 0.0
        %294 = vmatpush.msra.mxu0 0.0
        %295 = vmatpush.msra.mxu0 0.0
        %296 = vmatpush.msra.mxu0 0.0
        %297 = vmatpush.msra.mxu0 0.0
        %298 = vmatpush.msra.mxu0 0.0
        %299 = vmatpush.msra.mxu0 0.0
        %300 = vmatpush.msra.mxu0 0.0
        %301 = vmatpush.msra.mxu0 0.0
        %v302 = vand.u32 %v214, 4294901760
        %v303 = vsub.f32 %v214, %v302
        %304 = vmatpush.msra.mxu0 %v303
        %v305 = vand.u32 %v213, 4294901760
        %v306 = vsub.f32 %v213, %v305
        %307 = vmatpush.msra.mxu0 %v306
        %v308 = vand.u32 %v212, 4294901760
        %v309 = vsub.f32 %v212, %v308
        %310 = vmatpush.msra.mxu0 %v309
        %v311 = vand.u32 %v211, 4294901760
        %v312 = vsub.f32 %v211, %v311
        %313 = vmatpush.msra.mxu0 %v312
        %v314 = vand.u32 %v218, 4294901760
        %v315 = vsub.f32 %v218, %v314
        %316 = vmatmul.f32.gmra.mxu0 %v315
        %v317 = vpop.f32.mrf.mxu0
        %v318 = vadd.f32 %v288, %v317
        %319 = vdwg.mxu0
        %320 = vmatpush.msra.mxu0 0.0
        %321 = vmatpush.msra.mxu0 0.0
        %322 = vmatpush.msra.mxu0 0.0
        %323 = vmatpush.msra.mxu0 0.0
        %324 = vmatpush.msra.mxu0 0.0
        %325 = vmatpush.msra.mxu0 0.0
        %326 = vmatpush.msra.mxu0 0.0
        %327 = vmatpush.msra.mxu0 0.0
        %328 = vmatpush.msra.mxu0 0.0
        %329 = vmatpush.msra.mxu0 0.0
        %330 = vmatpush.msra.mxu0 0.0
        %331 = vmatpush.msra.mxu0 0.0
        %v332 = vand.u32 %v214, 4294901760
        %333 = vmatpush.msra.mxu0 %v332
        %v334 = vand.u32 %v213, 4294901760
        %335 = vmatpush.msra.mxu0 %v334
        %v336 = vand.u32 %v212, 4294901760
        %337 = vmatpush.msra.mxu0 %v336
        %v338 = vand.u32 %v211, 4294901760
        %339 = vmatpush.msra.mxu0 %v338
        %v340 = vand.u32 %v218, 4294901760
        %v341 = vsub.f32 %v218, %v340
        %v342 = vand.u32 %v341, 4294901760
        %343 = vmatmul.f32.gmra.mxu0 %v342
        %v344 = vpop.f32.mrf.mxu0
        %v345 = vadd.f32 %v318, %v344
        %346 = vdwg.mxu0
        %347 = vmatpush.msra.mxu0 0.0
        %348 = vmatpush.msra.mxu0 0.0
        %349 = vmatpush.msra.mxu0 0.0
        %350 = vmatpush.msra.mxu0 0.0
        %351 = vmatpush.msra.mxu0 0.0
        %352 = vmatpush.msra.mxu0 0.0
        %353 = vmatpush.msra.mxu0 0.0
        %354 = vmatpush.msra.mxu0 0.0
        %355 = vmatpush.msra.mxu0 0.0
        %356 = vmatpush.msra.mxu0 0.0
        %357 = vmatpush.msra.mxu0 0.0
        %358 = vmatpush.msra.mxu0 0.0
        %v359 = vand.u32 %v214, 4294901760
        %v360 = vsub.f32 %v214, %v359
        %v361 = vand.u32 %v360, 4294901760
        %362 = vmatpush.msra.mxu0 %v361
        %v363 = vand.u32 %v213, 4294901760
        %v364 = vsub.f32 %v213, %v363
        %v365 = vand.u32 %v364, 4294901760
        %366 = vmatpush.msra.mxu0 %v365
        %v367 = vand.u32 %v212, 4294901760
        %v368 = vsub.f32 %v212, %v367
        %v369 = vand.u32 %v368, 4294901760
        %370 = vmatpush.msra.mxu0 %v369
        %v371 = vand.u32 %v211, 4294901760
        %v372 = vsub.f32 %v211, %v371
        %v373 = vand.u32 %v372, 4294901760
        %374 = vmatpush.msra.mxu0 %v373
        %v375 = vand.u32 %v218, 4294901760
        %376 = vmatmul.f32.gmra.mxu0 %v375
        %v377 = vpop.f32.mrf.mxu0
        %v378 = vadd.f32 %v345, %v377
        %379 = vdwg.mxu0
        %380 = vmatpush.msra.mxu0 0.0
        %381 = vmatpush.msra.mxu0 0.0
        %382 = vmatpush.msra.mxu0 0.0
        %383 = vmatpush.msra.mxu0 0.0
        %384 = vmatpush.msra.mxu0 0.0
        %385 = vmatpush.msra.mxu0 0.0
        %386 = vmatpush.msra.mxu0 0.0
        %387 = vmatpush.msra.mxu0 0.0
        %388 = vmatpush.msra.mxu0 0.0
        %389 = vmatpush.msra.mxu0 0.0
        %390 = vmatpush.msra.mxu0 0.0
        %391 = vmatpush.msra.mxu0 0.0
        %v392 = vand.u32 %v214, 4294901760
        %393 = vmatpush.msra.mxu0 %v392
        %v394 = vand.u32 %v213, 4294901760
        %395 = vmatpush.msra.mxu0 %v394
        %v396 = vand.u32 %v212, 4294901760
        %397 = vmatpush.msra.mxu0 %v396
        %v398 = vand.u32 %v211, 4294901760
        %399 = vmatpush.msra.mxu0 %v398
        %v400 = vand.u32 %v218, 4294901760
        %401 = vmatmul.f32.gmra.mxu0 %v400
        %v402 = vpop.f32.mrf.mxu0
        %v403 = vadd.f32 %v378, %v402
        %404 = vdwg.mxu0
        %v405 = vmax.f32 %v403, 0.0
        %v406 = vld [vmem:[%s2] sm:$0xff]
        %v407 = vld [vmem:[%s2 + $0x8] sm:$0xff]
        %v408 = vld [vmem:[%s2 + $0x10] sm:$0xff]
        %v409 = vld [vmem:[%s2 + $0x18] sm:$0xff]
        %vm410 = vcmask 15360
        %v412 = vsel %vm410, %v406, 0
        %v415 = vsel %vm410, %v407, 0
        %v418 = vsel %vm410, %v408, 0
        %v421 = vsel %vm410, %v409, 0
        %vm423 = vcmask 1041408
        %v425 = vsel %vm423, %v405, 0
        %427 = vmatpush.msra.mxu0 0.0
        %428 = vmatpush.msra.mxu0 0.0
        %429 = vmatpush.msra.mxu0 0.0
        %430 = vmatpush.msra.mxu0 0.0
        %431 = vmatpush.msra.mxu0 0.0
        %432 = vmatpush.msra.mxu0 0.0
        %433 = vmatpush.msra.mxu0 0.0
        %434 = vmatpush.msra.mxu0 0.0
        %435 = vmatpush.msra.mxu0 0.0
        %436 = vmatpush.msra.mxu0 0.0
        %437 = vmatpush.msra.mxu0 0.0
        %438 = vmatpush.msra.mxu0 0.0
        %439 = vmatpush.msra.mxu0 0.0
        %440 = vmatpush.msra.mxu0 0.0
        %441 = vmatpush.msra.mxu0 0.0
        %v442 = vand.u32 %v425, 4294901760
        %443 = vmatpush.msra.mxu0 %v442
        %v444 = vand.u32 %v412, 4294901760
        %v445 = vsub.f32 %v412, %v444
        %v446 = vand.u32 %v445, 4294901760
        %v447 = vsub.f32 %v445, %v446
        %v448 = vand.u32 %v447, 4294901760
        %449 = vmatmul.f32.gmra.mxu0 %v448
        %v450 = vpop.f32.mrf.mxu0
        %v451 = vadd.f32 0.0, %v450
        %v452 = vand.u32 %v415, 4294901760
        %v453 = vsub.f32 %v415, %v452
        %v454 = vand.u32 %v453, 4294901760
        %v455 = vsub.f32 %v453, %v454
        %v456 = vand.u32 %v455, 4294901760
        %457 = vmatmul.f32.gmra.mxu0 %v456
        %v458 = vpop.f32.mrf.mxu0
        %v459 = vadd.f32 0.0, %v458
        %v460 = vand.u32 %v418, 4294901760
        %v461 = vsub.f32 %v418, %v460
        %v462 = vand.u32 %v461, 4294901760
        %v463 = vsub.f32 %v461, %v462
        %v464 = vand.u32 %v463, 4294901760
        %465 = vmatmul.f32.gmra.mxu0 %v464
        %v466 = vpop.f32.mrf.mxu0
        %v467 = vadd.f32 0.0, %v466
        %v468 = vand.u32 %v421, 4294901760
        %v469 = vsub.f32 %v421, %v468
        %v470 = vand.u32 %v469, 4294901760
        %v471 = vsub.f32 %v469, %v470
        %v472 = vand.u32 %v471, 4294901760
        %473 = vmatmul.f32.gmra.mxu0 %v472
        %v474 = vpop.f32.mrf.mxu0
        %v475 = vadd.f32 0.0, %v474
        %476 = vdwg.mxu0
        %477 = vmatpush.msra.mxu0 0.0
        %478 = vmatpush.msra.mxu0 0.0
        %479 = vmatpush.msra.mxu0 0.0
        %480 = vmatpush.msra.mxu0 0.0
        %481 = vmatpush.msra.mxu0 0.0
        %482 = vmatpush.msra.mxu0 0.0
        %483 = vmatpush.msra.mxu0 0.0
        %484 = vmatpush.msra.mxu0 0.0
        %485 = vmatpush.msra.mxu0 0.0
        %486 = vmatpush.msra.mxu0 0.0
        %487 = vmatpush.msra.mxu0 0.0
        %488 = vmatpush.msra.mxu0 0.0
        %489 = vmatpush.msra.mxu0 0.0
        %490 = vmatpush.msra.mxu0 0.0
        %491 = vmatpush.msra.mxu0 0.0
        %v492 = vand.u32 %v425, 4294901760
        %v493 = vsub.f32 %v425, %v492
        %v494 = vand.u32 %v493, 4294901760
        %v495 = vsub.f32 %v493, %v494
        %v496 = vand.u32 %v495, 4294901760
        %497 = vmatpush.msra.mxu0 %v496
        %v498 = vand.u32 %v412, 4294901760
        %499 = vmatmul.f32.gmra.mxu0 %v498
        %v500 = vpop.f32.mrf.mxu0
        %v501 = vadd.f32 %v451, %v500
        %v502 = vand.u32 %v415, 4294901760
        %503 = vmatmul.f32.gmra.mxu0 %v502
        %v504 = vpop.f32.mrf.mxu0
        %v505 = vadd.f32 %v459, %v504
        %v506 = vand.u32 %v418, 4294901760
        %507 = vmatmul.f32.gmra.mxu0 %v506
        %v508 = vpop.f32.mrf.mxu0
        %v509 = vadd.f32 %v467, %v508
        %v510 = vand.u32 %v421, 4294901760
        %511 = vmatmul.f32.gmra.mxu0 %v510
        %v512 = vpop.f32.mrf.mxu0
        %v513 = vadd.f32 %v475, %v512
        %514 = vdwg.mxu0
        %515 = vmatpush.msra.mxu0 0.0
        %516 = vmatpush.msra.mxu0 0.0
        %517 = vmatpush.msra.mxu0 0.0
        %518 = vmatpush.msra.mxu0 0.0
        %519 = vmatpush.msra.mxu0 0.0
        %520 = vmatpush.msra.mxu0 0.0
        %521 = vmatpush.msra.mxu0 0.0
        %522 = vmatpush.msra.mxu0 0.0
        %523 = vmatpush.msra.mxu0 0.0
        %524 = vmatpush.msra.mxu0 0.0
        %525 = vmatpush.msra.mxu0 0.0
        %526 = vmatpush.msra.mxu0 0.0
        %527 = vmatpush.msra.mxu0 0.0
        %528 = vmatpush.msra.mxu0 0.0
        %529 = vmatpush.msra.mxu0 0.0
        %v530 = vand.u32 %v425, 4294901760
        %v531 = vsub.f32 %v425, %v530
        %532 = vmatpush.msra.mxu0 %v531
        %v533 = vand.u32 %v412, 4294901760
        %v534 = vsub.f32 %v412, %v533
        %535 = vmatmul.f32.gmra.mxu0 %v534
        %v536 = vpop.f32.mrf.mxu0
        %v537 = vadd.f32 %v501, %v536
        %v538 = vand.u32 %v415, 4294901760
        %v539 = vsub.f32 %v415, %v538
        %540 = vmatmul.f32.gmra.mxu0 %v539
        %v541 = vpop.f32.mrf.mxu0
        %v542 = vadd.f32 %v505, %v541
        %v543 = vand.u32 %v418, 4294901760
        %v544 = vsub.f32 %v418, %v543
        %545 = vmatmul.f32.gmra.mxu0 %v544
        %v546 = vpop.f32.mrf.mxu0
        %v547 = vadd.f32 %v509, %v546
        %v548 = vand.u32 %v421, 4294901760
        %v549 = vsub.f32 %v421, %v548
        %550 = vmatmul.f32.gmra.mxu0 %v549
        %v551 = vpop.f32.mrf.mxu0
        %v552 = vadd.f32 %v513, %v551
        %553 = vdwg.mxu0
        %554 = vmatpush.msra.mxu0 0.0
        %555 = vmatpush.msra.mxu0 0.0
        %556 = vmatpush.msra.mxu0 0.0
        %557 = vmatpush.msra.mxu0 0.0
        %558 = vmatpush.msra.mxu0 0.0
        %559 = vmatpush.msra.mxu0 0.0
        %560 = vmatpush.msra.mxu0 0.0
        %561 = vmatpush.msra.mxu0 0.0
        %562 = vmatpush.msra.mxu0 0.0
        %563 = vmatpush.msra.mxu0 0.0
        %564 = vmatpush.msra.mxu0 0.0
        %565 = vmatpush.msra.mxu0 0.0
        %566 = vmatpush.msra.mxu0 0.0
        %567 = vmatpush.msra.mxu0 0.0
        %568 = vmatpush.msra.mxu0 0.0
        %v569 = vand.u32 %v425, 4294901760
        %570 = vmatpush.msra.mxu0 %v569
        %v571 = vand.u32 %v412, 4294901760
        %v572 = vsub.f32 %v412, %v571
        %v573 = vand.u32 %v572, 4294901760
        %574 = vmatmul.f32.gmra.mxu0 %v573
        %v575 = vpop.f32.mrf.mxu0
        %v576 = vadd.f32 %v537, %v575
        %v577 = vand.u32 %v415, 4294901760
        %v578 = vsub.f32 %v415, %v577
        %v579 = vand.u32 %v578, 4294901760
        %580 = vmatmul.f32.gmra.mxu0 %v579
        %v581 = vpop.f32.mrf.mxu0
        %v582 = vadd.f32 %v542, %v581
        %v583 = vand.u32 %v418, 4294901760
        %v584 = vsub.f32 %v418, %v583
        %v585 = vand.u32 %v584, 4294901760
        %586 = vmatmul.f32.gmra.mxu0 %v585
        %v587 = vpop.f32.mrf.mxu0
        %v588 = vadd.f32 %v547, %v587
        %v589 = vand.u32 %v421, 4294901760
        %v590 = vsub.f32 %v421, %v589
        %v591 = vand.u32 %v590, 4294901760
        %592 = vmatmul.f32.gmra.mxu0 %v591
        %v593 = vpop.f32.mrf.mxu0
        %v594 = vadd.f32 %v552, %v593
        %595 = vdwg.mxu0
        %596 = vmatpush.msra.mxu0 0.0
        %597 = vmatpush.msra.mxu0 0.0
        %598 = vmatpush.msra.mxu0 0.0
        %599 = vmatpush.msra.mxu0 0.0
        %600 = vmatpush.msra.mxu0 0.0
        %601 = vmatpush.msra.mxu0 0.0
        %602 = vmatpush.msra.mxu0 0.0
        %603 = vmatpush.msra.mxu0 0.0
        %604 = vmatpush.msra.mxu0 0.0
        %605 = vmatpush.msra.mxu0 0.0
        %606 = vmatpush.msra.mxu0 0.0
        %607 = vmatpush.msra.mxu0 0.0
        %608 = vmatpush.msra.mxu0 0.0
        %609 = vmatpush.msra.mxu0 0.0
        %610 = vmatpush.msra.mxu0 0.0
        %v611 = vand.u32 %v425, 4294901760
        %v612 = vsub.f32 %v425, %v611
        %v613 = vand.u32 %v612, 4294901760
        %614 = vmatpush.msra.mxu0 %v613
        %v615 = vand.u32 %v412, 4294901760
        %616 = vmatmul.f32.gmra.mxu0 %v615
        %v617 = vpop.f32.mrf.mxu0
        %v618 = vadd.f32 %v576, %v617
        %v619 = vand.u32 %v415, 4294901760
        %620 = vmatmul.f32.gmra.mxu0 %v619
        %v621 = vpop.f32.mrf.mxu0
        %v622 = vadd.f32 %v582, %v621
        %v623 = vand.u32 %v418, 4294901760
        %624 = vmatmul.f32.gmra.mxu0 %v623
        %v625 = vpop.f32.mrf.mxu0
        %v626 = vadd.f32 %v588, %v625
        %v627 = vand.u32 %v421, 4294901760
        %628 = vmatmul.f32.gmra.mxu0 %v627
        %v629 = vpop.f32.mrf.mxu0
        %v630 = vadd.f32 %v594, %v629
        %631 = vdwg.mxu0
        %632 = vmatpush.msra.mxu0 0.0
        %633 = vmatpush.msra.mxu0 0.0
        %634 = vmatpush.msra.mxu0 0.0
        %635 = vmatpush.msra.mxu0 0.0
        %636 = vmatpush.msra.mxu0 0.0
        %637 = vmatpush.msra.mxu0 0.0
        %638 = vmatpush.msra.mxu0 0.0
        %639 = vmatpush.msra.mxu0 0.0
        %640 = vmatpush.msra.mxu0 0.0
        %641 = vmatpush.msra.mxu0 0.0
        %642 = vmatpush.msra.mxu0 0.0
        %643 = vmatpush.msra.mxu0 0.0
        %644 = vmatpush.msra.mxu0 0.0
        %645 = vmatpush.msra.mxu0 0.0
        %646 = vmatpush.msra.mxu0 0.0
        %v647 = vand.u32 %v425, 4294901760
        %648 = vmatpush.msra.mxu0 %v647
        %v649 = vand.u32 %v412, 4294901760
        %650 = vmatmul.f32.gmra.mxu0 %v649
        %v651 = vpop.f32.mrf.mxu0
        %v652 = vadd.f32 %v618, %v651
        %v653 = vand.u32 %v415, 4294901760
        %654 = vmatmul.f32.gmra.mxu0 %v653
        %v655 = vpop.f32.mrf.mxu0
        %v656 = vadd.f32 %v622, %v655
        %v657 = vand.u32 %v418, 4294901760
        %658 = vmatmul.f32.gmra.mxu0 %v657
        %v659 = vpop.f32.mrf.mxu0
        %v660 = vadd.f32 %v626, %v659
        %v661 = vand.u32 %v421, 4294901760
        %662 = vmatmul.f32.gmra.mxu0 %v661
        %v663 = vpop.f32.mrf.mxu0
        %v664 = vadd.f32 %v630, %v663
        %665 = vdwg.mxu0
        %v666 = vsub.f32 0.0, %v652
        %v667 = vsub.f32 0.0, %v656
        %v668 = vsub.f32 0.0, %v660
        %v669 = vsub.f32 0.0, %v664
        %v670 = vmul.f32 %v666, 1.442695
        %v671 = vpow.pop %v670
        %v672 = vmul.f32 %v667, 1.442695
        %v673 = vpow.pop %v672
        %v674 = vmul.f32 %v668, 1.442695
        %v675 = vpow.pop %v674
        %v676 = vmul.f32 %v669, 1.442695
        %v677 = vpow.pop %v676
        %v678 = vadd.f32 %v671, 1.0
        %v679 = vadd.f32 %v673, 1.0
        %v680 = vadd.f32 %v675, 1.0
        %v681 = vadd.f32 %v677, 1.0
        %v682 = vrcp.pop %v678
        %v683 = vmul.f32 %v678, %v682
        %v684 = vsub.f32 1.0, %v683
        %v685 = vmul.f32 %v682, %v684
        %v686 = vadd.f32 %v682, %v685
        %vm687 = vweird.f32 %v678
        %vm688 = vweird.f32 %v682
        %vm689 = vmor %vm687, %vm688
        %v690 = vsel %vm689, %v682, %v686
        %v691 = vand.u32 2147483647, %v678
        %vm692 = vcmp.eq.f32.partialorder %v691, 8.507059e+37
        %v693 = vand.u32 %v678, 2147483648
        %v694 = vor.u32 1.1754944e-38, %v693
        %v695 = vsel %vm692, %v694, %v690
        %v696 = vmul.f32 1.0, %v695
        %v697 = vrcp.pop %v679
        %v698 = vmul.f32 %v679, %v697
        %v699 = vsub.f32 1.0, %v698
        %v700 = vmul.f32 %v697, %v699
        %v701 = vadd.f32 %v697, %v700
        %vm702 = vweird.f32 %v679
        %vm703 = vweird.f32 %v697
        %vm704 = vmor %vm702, %vm703
        %v705 = vsel %vm704, %v697, %v701
        %v706 = vand.u32 2147483647, %v679
        %vm707 = vcmp.eq.f32.partialorder %v706, 8.507059e+37
        %v708 = vand.u32 %v679, 2147483648
        %v709 = vor.u32 1.1754944e-38, %v708
        %v710 = vsel %vm707, %v709, %v705
        %v711 = vmul.f32 1.0, %v710
        %v712 = vrcp.pop %v680
        %v713 = vmul.f32 %v680, %v712
        %v714 = vsub.f32 1.0, %v713
        %v715 = vmul.f32 %v712, %v714
        %v716 = vadd.f32 %v712, %v715
        %vm717 = vweird.f32 %v680
        %vm718 = vweird.f32 %v712
        %vm719 = vmor %vm717, %vm718
        %v720 = vsel %vm719, %v712, %v716
        %v721 = vand.u32 2147483647, %v680
        %vm722 = vcmp.eq.f32.partialorder %v721, 8.507059e+37
        %v723 = vand.u32 %v680, 2147483648
        %v724 = vor.u32 1.1754944e-38, %v723
        %v725 = vsel %vm722, %v724, %v720
        %v726 = vmul.f32 1.0, %v725
        %v727 = vrcp.pop %v681
        %v728 = vmul.f32 %v681, %v727
        %v729 = vsub.f32 1.0, %v728
        %v730 = vmul.f32 %v727, %v729
        %v731 = vadd.f32 %v727, %v730
        %vm732 = vweird.f32 %v681
        %vm733 = vweird.f32 %v727
        %vm734 = vmor %vm732, %vm733
        %v735 = vsel %vm734, %v727, %v731
        %v736 = vand.u32 2147483647, %v681
        %vm737 = vcmp.eq.f32.partialorder %v736, 8.507059e+37
        %v738 = vand.u32 %v681, 2147483648
        %v739 = vor.u32 1.1754944e-38, %v738
        %v740 = vsel %vm737, %v739, %v735
        %v741 = vmul.f32 1.0, %v740
        %743 = vset.pattern.permute.xlu0 0
        %744 = vperm.xlu0 %743, %v696
        %v745 = vpop.permute.xlu0 %744
        %748 = vset.pattern.permute.xlu0 0
        %749 = vperm.xlu0 %748, %v711
        %v750 = vpop.permute.xlu0 %749
        %753 = vset.pattern.permute.xlu0 0
        %754 = vperm.xlu0 %753, %v726
        %v755 = vpop.permute.xlu0 %754
        %758 = vset.pattern.permute.xlu0 0
        %759 = vperm.xlu0 %758, %v741
        %v760 = vpop.permute.xlu0 %759
        %v762 = vmul.f32 %v191, %v745
        %v763 = vmul.f32 %v192, %v745
        %v764 = vmul.f32 %v193, %v750
        %v765 = vmul.f32 %v194, %v750
        %v766 = vmul.f32 %v195, %v755
        %v767 = vmul.f32 %v196, %v755
        %v768 = vmul.f32 %v197, %v760
        %v769 = vmul.f32 %v198, %v760
        %770 = vst [vmem:[%s190] sm:$0xff] %v762
        %771 = vst [vmem:[%s190 + $0x8] sm:$0xff] %v763
        %772 = vst [vmem:[%s190 + $0x10] sm:$0xff] %v764
        %773 = vst [vmem:[%s190 + $0x18] sm:$0xff] %v765
        %774 = vst [vmem:[%s190 + $0x20] sm:$0xff] %v766
        %775 = vst [vmem:[%s190 + $0x28] sm:$0xff] %v767
        %776 = vst [vmem:[%s190 + $0x30] sm:$0xff] %v768
        %777 = vst [vmem:[%s190 + $0x38] sm:$0xff] %v769
        %s778 = sand.u32 %s96, 1
        %s779 = scalar_lea.sflag [#allocation4], %s778
        %s780 = sand.u32 %s96, 1
        %s781 = smul.addr %s780, 64
        %s782 = scalar_lea.vmem [#allocation5], %s781
        // Predicated region
        $region37: #{tpu_custom_call.1} parent=31 // pred_check
          %p783 = pneg %p106
        $region38: #{tpu_custom_call.1} parent=31 // pred_check_branch
          %785 = sbr.rel (%p783) target = $region40
        $region39: #{tpu_custom_call.1} parent=31 // pred_region
          %787 = vsyncadd %s779, 0
          %s788 = smul.addr %s20, 8
          %s789 = smul.addr %s788, 8
          %s790 = scalar_lea.hbm %s3, %s789
          %s791 = sshll.u32 %s782, 4
          %s792 = int_to_ptr.vmem [resolvable:$true] %s791
          %s793 = sshll.u32 %s790, 4
          %s794 = int_to_ptr.hbm [resolvable:$true] %s793
          %799 = dma.vmem_to_hbm [thread:$0]  %s792, 1024, %s794, %s779, 256, 256, 16
        $region40: #{tpu_custom_call.1} parent=31 // pred_fallthru
          _
      $region32: #{tpu_custom_call.1} parent=5 // pred_fallthru
        _
      %p800 = scmp.le.s32.totalorder 2, %s15
      // Predicated region
      $region41: #{tpu_custom_call.1} parent=5 // pred_check
        %p801 = pneg %p800
      $region42: #{tpu_custom_call.1} parent=5 // pred_check_branch
        %803 = sbr.rel (%p801) target = $region44
      $region43: #{tpu_custom_call.1} parent=5 // pred_region
        %s804 = ssub.s32 %s15, 2
        // Predicated region
        $region45: #{tpu_custom_call.1} parent=43 // pred_check
          %p805 = pneg %p112
        $region46: #{tpu_custom_call.1} parent=43 // pred_check_branch
          %807 = sbr.rel (%p805) target = $region48
        $region47: #{tpu_custom_call.1} parent=43 // pred_region
          %s808 = sand.u32 %s97, 1
          %s809 = scalar_lea.sflag [#allocation4], %s808
          %s810 = sand.u32 %s97, 1
          %s811 = smul.addr %s810, 64
          %s812 = scalar_lea.vmem [#allocation5], %s811
          %814 = dma.done %s809, 1024
        $region48: #{tpu_custom_call.1} parent=43 // pred_fallthru
          _
      $region44: #{tpu_custom_call.1} parent=5 // pred_fallthru
        _
    $region6: #{tpu_custom_call.1} parent=1 // loop_footer
      %s19 = sadd.s32 1, %s15
    $region7: #{tpu_custom_call.1} parent=1 // loop_footer_branch
      %14 = sbr.rel target = $region3
    $region8: #{tpu_custom_call.1} parent=1 // loop_exit
      _
    %815 = vsyncpa [#allocation3], 1
    %s816 = scalar_lea.sflag [#allocation3], 1
    %817 = vsyncpa %s816, 1
    %818 = vsyncpa [#allocation4], 1
    %s819 = scalar_lea.sflag [#allocation4], 1
    %820 = vsyncpa %s819, 1

</llo_original>
